<compile_context>
chip_gen: v5e
topology: v5e:2x2
jax: 0.10.0
libtpu: 0.0.40
codegen_flags: <defaults>
</compile_context>

<pallas_src>
import functools

import jax
import jax.numpy as jnp
from jax import lax
from jax.experimental import pallas as pl
from jax.experimental.pallas import tpu as pltpu


# --------------------------------------------------------------------------- #
# Pallas kernel: full unit (1x1 -> BN -> ReLU -> 3x3 dw -> BN -> 1x1 -> BN ->
# ReLU, plus x1 passthrough + channel shuffle) for Nb images per grid step.
# Packed layout: [n, h, w*C + c].
# --------------------------------------------------------------------------- #
def _unit_kernel(H, W, BF,
                 x_ref, w1_ref, b1_ref, t_ref, b2_ref, w2_ref, b3_ref, p1_ref,
                 out_ref, ypad_ref):
    C = 2 * BF
    WC = W * BF            # lanes of the branch2 intermediate (128 at test shape)
    WC2 = W * C            # lanes of the packed input/output (256 at test shape)
    Nb = x_ref.shape[0]
    R = Nb * H             # rows fed to the MXU

    # (Nb, H, WC2) -> (R, WC2): collapses major dims only, layout-preserving.
    x = x_ref[...].reshape(R, WC2)

    # --- 1x1 conv #1 (x2-channel selection + BN1 scale folded into w1) + ReLU ---
    h1 = jnp.dot(x, w1_ref[...], preferred_element_type=jnp.float32) + b1_ref[...]
    h1 = jnp.maximum(h1, 0.0)                                   # (R, WC)

    # --- 3x3 depthwise conv + BN2 ---
    # W-direction taps + per-channel weights + BN2 scale live in the three band
    # matrices t_ref[kh]; only the H shift needs data movement (lane-dense
    # scratch: one store + three sublane-shifted loads).
    zrow = jnp.zeros((Nb, 1, WC), jnp.float32)
    ypad_ref[:, pl.ds(0, 1), :] = zrow                          # top halo row
    ypad_ref[:, pl.ds(H + 1, 1), :] = zrow                      # bottom halo row
    ypad_ref[:, pl.ds(1, H), :] = h1.reshape(Nb, H, WC)

    acc = b2_ref[...]                                           # (1, WC), broadcasts
    for kh in range(3):
        yk = ypad_ref[:, pl.ds(kh, H), :].reshape(R, WC)
        acc = acc + jnp.dot(yk, t_ref[kh], preferred_element_type=jnp.float32)

    # --- 1x1 conv #2 (+ BN3, shuffled odd-slot scatter folded into w2) + ReLU ---
    z = jnp.dot(acc, w2_ref[...], preferred_element_type=jnp.float32) + b3_ref[...]
    z = jnp.maximum(z, 0.0)                                     # (R, WC2), zeros at even slots

    # --- x1 passthrough scattered into even slots (channel shuffle folded) ---
    out = z + jnp.dot(x, p1_ref[...], preferred_element_type=jnp.float32)
    out_ref[...] = out.reshape(Nb, H, WC2).astype(out_ref.dtype)


def _choose_nb(N, H, W, C):
    """Largest divisor of N whose in+out blocks stay small (v7x VMEM-safe)."""
    budget = 2 * 1024 * 1024                      # bytes for input+output block
    per_img = H * W * C * 4 * 2
    for cand in range(N, 0, -1):
        if N % cand == 0 and cand * per_img <= budget:
            return cand
    return 1


def shufflenet_unit_pallas(x_p, kp, H, W, C):
    N = x_p.shape[0]
    BF = C // 2
    WC, WC2 = W * BF, W * C
    Nb = _choose_nb(N, H, W, C)
    grid = (N // Nb,)

    kernel = functools.partial(_unit_kernel, H, W, BF)

    def const_spec(shape):
        # Constant index_map: Pallas keeps the block resident (no re-fetch).
        return pl.BlockSpec(shape, lambda i: (0,) * len(shape))

    grid_spec = pltpu.PrefetchScalarGridSpec(
        num_scalar_prefetch=0,
        grid=grid,
        in_specs=[
            pl.BlockSpec((Nb, H, WC2), lambda i: (i, 0, 0)),    # packed input
            const_spec((WC2, WC)),                              # w1 (block-diag, BN1 folded)
            const_spec((1, WC)),                                # b1
            const_spec((3, WC, WC)),                            # depthwise band matrices
            const_spec((1, WC)),                                # b2
            const_spec((WC, WC2)),                              # w2 (odd-slot scatter, BN3 folded)
            const_spec((1, WC2)),                               # b3 (odd slots)
            const_spec((WC2, WC2)),                             # x1 even-slot scatter
        ],
        out_specs=pl.BlockSpec((Nb, H, WC2), lambda i: (i, 0, 0)),
        scratch_shapes=[pltpu.VMEM((Nb, H + 2, WC), jnp.float32)],
    )
    return pl.pallas_call(
        kernel,
        out_shape=jax.ShapeDtypeStruct((N, H, WC2), jnp.float32),
        grid_spec=grid_spec,
        compiler_params=pltpu.CompilerParams(
            dimension_semantics=("parallel",)),
    )(x_p, kp["w1"], kp["b1"], kp["t"], kp["b2"], kp["w2"], kp["b3"], kp["p1"])


def inverted_residual_forward(x_nchw, kernel_params):
    """stride=1 InvertedResidual forward.  x_nchw: (N, C, H, W)."""
    N, C, H, W = x_nchw.shape
    # Pack NCHW -> (N, H, W*C) so the last dim is lane-dense (W*C >= 128 at test
    # shape).  The split/shuffle/cat is folded into the kernel, so this single
    # transpose (and its inverse) is the only XLA glue around the pallas_call.
    x_p = jnp.transpose(x_nchw, (0, 2, 3, 1)).reshape(N, H, W * C)
    out_p = shufflenet_unit_pallas(x_p, kernel_params, H, W, C)
    return jnp.transpose(out_p.reshape(N, H, W, C), (0, 3, 1, 2))


# --------------------------------------------------------------------------- #
# Deterministic PyTorch-layout parameters + packing into kernel weights.
# --------------------------------------------------------------------------- #
def make_params(key, bf):
    ks = jax.random.split(key, 6)
    eps = 1e-5
    w_pw1 = 0.1 * jax.random.normal(ks[0], (bf, bf, 1, 1), jnp.float32)  # OIHW
    w_dw = 0.1 * jax.random.normal(ks[1], (bf, 1, 3, 3), jnp.float32)    # OIHW, groups=bf
    w_pw2 = 0.1 * jax.random.normal(ks[2], (bf, bf, 1, 1), jnp.float32)

    def bn_params(k):
        k1, k2, k3, k4 = jax.random.split(k, 4)
        gamma = 1.0 + 0.1 * jax.random.normal(k1, (bf,), jnp.float32)
        beta = 0.05 * jax.random.normal(k2, (bf,), jnp.float32)
        mean = 0.05 * jax.random.normal(k3, (bf,), jnp.float32)
        var = jax.random.uniform(k4, (bf,), jnp.float32, minval=0.5, maxval=1.5)
        return gamma, beta, mean, var

    return dict(w_pw1=w_pw1, w_dw=w_dw, w_pw2=w_pw2,
                bn1=bn_params(ks[3]), bn2=bn_params(ks[4]), bn3=bn_params(ks[5]),
                eps=eps)


def pack_params(tp, W):
    """Build packed-layout kernel weights (BN scales folded, shuffle folded)."""
    w_pw1, w_dw, w_pw2, eps = tp["w_pw1"], tp["w_dw"], tp["w_pw2"], tp["eps"]
    BF = w_pw1.shape[0]
    C = 2 * BF

    def fold(bn):
        g, b, m, v = bn
        s = g / jnp.sqrt(v + eps)
        return s, b - m * s

    s1, b1 = fold(tp["bn1"])
    s2, b2 = fold(tp["bn2"])
    s3, b3 = fold(tp["bn3"])

    eye_w = jnp.eye(W, dtype=jnp.float32)

    # 1x1 conv #1: picks x2 channels (offset BF inside each pixel's C-block),
    # BN1 scale folded into output columns.
    base1 = w_pw1[:, :, 0, 0].T * s1[None, :]                      # (BF_in, BF_out)
    blk1 = jnp.zeros((C, BF), jnp.float32).at[BF:, :].set(base1)
    w1_full = jnp.kron(eye_w, blk1)                                # (W*C, W*BF)
    b1_big = jnp.tile(b1, W)[None, :]                              # (1, W*BF)

    # 3x3 depthwise conv as three (W*BF, W*BF) band matrices (one per kh);
    # per-channel taps and BN2 scale folded in, W-boundary handled by the band.
    t_rows = []
    for kh in range(3):
        t = jnp.zeros((W * BF, W * BF), jnp.float32)
        for dw in (-1, 0, 1):
            taps = w_dw[:, 0, kh, dw + 1] * s2                     # (BF,)
            t = t + jnp.kron(jnp.eye(W, k=-dw, dtype=jnp.float32), jnp.diag(taps))
        t_rows.append(t)
    t_all = jnp.stack(t_rows)                                      # (3, W*BF, W*BF)
    b2_big = jnp.tile(b2, W)[None, :]                              # (1, W*BF)

    # 1x1 conv #2: branch2 channel co -> shuffled slot 2*co+1; BN3 scale folded.
    base2 = w_pw2[:, :, 0, 0].T * s3[None, :]                      # (BF, BF)
    blk2 = jnp.zeros((BF, C), jnp.float32).at[:, 1::2].set(base2)
    w2_int = jnp.kron(eye_w, blk2)                                 # (W*BF, W*C)
    b3_int = jnp.tile(jnp.zeros((C,), jnp.float32).at[1::2].set(b3), W)[None, :]

    # x1 passthrough: channel c -> shuffled slot 2*c (0/1 scatter matrix).
    blkp = jnp.zeros((C, C), jnp.float32).at[jnp.arange(BF), 2 * jnp.arange(BF)].set(1.0)
    p1 = jnp.kron(eye_w, blkp)                                     # (W*C, W*C)

    return dict(w1=w1_full, b1=b1_big, t=t_all, b2=b2_big,
                w2=w2_int, b3=b3_int, p1=p1)


# --------------------------------------------------------------------------- #
# Pure-JAX reference (mirrors the PyTorch module, eval-mode BN)
# --------------------------------------------------------------------------- #
def _bn_ref(x, bn, eps):
    g, b, m, v = bn
    inv = g / jnp.sqrt(v + eps)
    return (x - m[None, :, None, None]) * inv[None, :, None, None] + b[None, :, None, None]


def channel_shuffle_ref(x, groups):
    n, c, h, w = x.shape
    x = x.reshape(n, groups, c // groups, h, w)
    x = jnp.transpose(x, (0, 2, 1, 3, 4))
    return x.reshape(n, c, h, w)


def inverted_residual_ref(x, tp):
    n, c, h, w = x.shape
    bf = c // 2
    x1, x2 = x[:, :bf], x[:, bf:]
    dn = ('NCHW', 'OIHW', 'NCHW')
    y = lax.conv_general_dilated(x2, tp["w_pw1"], (1, 1), 'VALID',
                                 dimension_numbers=dn)
    y = jax.nn.relu(_bn_ref(y, tp["bn1"], tp["eps"]))
    y = lax.conv_general_dilated(y, tp["w_dw"], (1, 1), ((1, 1), (1, 1)),
                                 dimension_numbers=dn, feature_group_count=bf)
    y = _bn_ref(y, tp["bn2"], tp["eps"])
    y = lax.conv_general_dilated(y, tp["w_pw2"], (1, 1), 'VALID',
                                 dimension_numbers=dn)
    y = jax.nn.relu(_bn_ref(y, tp["bn3"], tp["eps"]))
    out = jnp.concatenate([x1, y], axis=1)
    return channel_shuffle_ref(out, 2)


if __name__ == "__main__":
    key = jax.random.PRNGKey(0)
    k_x, k_p = jax.random.split(key)

    # input_c = output_c = 16 (stride=1 requires input_c == 2 * branch_features)
    N, C, H, W = 2, 16, 16, 16
    x = jax.random.normal(k_x, (N, C, H, W), jnp.float32)
    torch_params = make_params(k_p, C // 2)
    kernel_params = pack_params(torch_params, W)

    out = jax.jit(inverted_residual_forward)(x, kernel_params)
    out = jax.block_until_ready(out)

    ref = inverted_residual_ref(x, torch_params)
    assert out.shape == ref.shape == (N, C, H, W)
    max_err = float(jnp.max(jnp.abs(out - ref)))
    assert max_err < 1e-2, f"max_err={max_err}"
    print("KERNEL_OK")
</pallas_src>

<mosaic_0001>
module attributes {stable_mosaic.version = 11 : i64} {
  func.func @_unit_kernel(%arg0: i32, %arg1: memref<2x16x256xf32, #tpu.memory_space<vmem>>, %arg2: memref<256x128xf32, #tpu.memory_space<vmem>>, %arg3: memref<1x128xf32, #tpu.memory_space<vmem>>, %arg4: memref<3x128x128xf32, #tpu.memory_space<vmem>>, %arg5: memref<1x128xf32, #tpu.memory_space<vmem>>, %arg6: memref<128x256xf32, #tpu.memory_space<vmem>>, %arg7: memref<1x256xf32, #tpu.memory_space<vmem>>, %arg8: memref<256x256xf32, #tpu.memory_space<vmem>>, %arg9: memref<2x16x256xf32, #tpu.memory_space<vmem>>, %arg10: memref<2x18x128xf32, #tpu.memory_space<vmem>>) attributes {dimension_semantics = [#tpu.dimension_semantics<parallel>], iteration_bounds = array<i64: 1>, scalar_prefetch = 0 : i64, scratch_operands = 1 : i64, tpu.core_type = #tpu.core_type<tc>, window_params = [{transform_indices = @transform_0, window_bounds = array<i64: 2, 16, 256>}, {pipeline_mode = #tpu.pipeline_mode<synchronous>, transform_indices = @transform_1, window_bounds = array<i64: 256, 128>}, {pipeline_mode = #tpu.pipeline_mode<synchronous>, transform_indices = @transform_2, window_bounds = array<i64: 1, 128>}, {pipeline_mode = #tpu.pipeline_mode<synchronous>, transform_indices = @transform_3, window_bounds = array<i64: 3, 128, 128>}, {pipeline_mode = #tpu.pipeline_mode<synchronous>, transform_indices = @transform_4, window_bounds = array<i64: 1, 128>}, {pipeline_mode = #tpu.pipeline_mode<synchronous>, transform_indices = @transform_5, window_bounds = array<i64: 128, 256>}, {pipeline_mode = #tpu.pipeline_mode<synchronous>, transform_indices = @transform_6, window_bounds = array<i64: 1, 256>}, {pipeline_mode = #tpu.pipeline_mode<synchronous>, transform_indices = @transform_7, window_bounds = array<i64: 256, 256>}, {transform_indices = @transform_8, window_bounds = array<i64: 2, 16, 256>}]} {
    %c0 = arith.constant 0 : index
    %c0_0 = arith.constant 0 : index
    %c0_1 = arith.constant 0 : index
    %0 = vector.load %arg1[%c0, %c0_0, %c0_1] : memref<2x16x256xf32, #tpu.memory_space<vmem>>, vector<2x16x256xf32>
    %1 = vector.shape_cast %0 : vector<2x16x256xf32> to vector<32x256xf32>
    %c0_2 = arith.constant 0 : index
    %c0_3 = arith.constant 0 : index
    %2 = vector.load %arg2[%c0_2, %c0_3] : memref<256x128xf32, #tpu.memory_space<vmem>>, vector<256x128xf32>
    %cst = arith.constant dense<0.000000e+00> : vector<32x128xf32>
    %3 = tpu.matmul %1, %2, %cst {dimension_numbers = #tpu.dot_dimension_numbers<[1], [0], [0], [1], [0, 0, 1, 1], [], []>} : vector<32x256xf32>, vector<256x128xf32>, vector<32x128xf32> -> vector<32x128xf32>
    %c0_4 = arith.constant 0 : index
    %c0_5 = arith.constant 0 : index
    %4 = vector.load %arg3[%c0_4, %c0_5] : memref<1x128xf32, #tpu.memory_space<vmem>>, vector<1x128xf32>
    %5 = vector.broadcast %4 : vector<1x128xf32> to vector<32x128xf32>
    %6 = arith.addf %3, %5 : vector<32x128xf32>
    %cst_6 = arith.constant 0.000000e+00 : f32
    %7 = vector.broadcast %cst_6 : f32 to vector<32x128xf32>
    %8 = arith.maximumf %6, %7 : vector<32x128xf32>
    %cst_7 = arith.constant 0.000000e+00 : f32
    %9 = vector.broadcast %cst_7 : f32 to vector<2x1x128xf32>
    %c0_8 = arith.constant 0 : index
    %c0_9 = arith.constant 0 : index
    %c0_10 = arith.constant 0 : index
    %10 = vector.load %arg10[%c0_8, %c0_9, %c0_10] : memref<2x18x128xf32, #tpu.memory_space<vmem>>, vector<2x1x128xf32>
    tpu.vector_store %arg10[%c0_8, %c0_9, %c0_10], %9 {strides = array<i32>} : memref<2x18x128xf32, #tpu.memory_space<vmem>>, vector<2x1x128xf32>,
    %c0_11 = arith.constant 0 : index
    %c17 = arith.constant 17 : index
    %c0_12 = arith.constant 0 : index
    %11 = vector.load %arg10[%c0_11, %c17, %c0_12] : memref<2x18x128xf32, #tpu.memory_space<vmem>>, vector<2x1x128xf32>
    tpu.vector_store %arg10[%c0_11, %c17, %c0_12], %9 {strides = array<i32>} : memref<2x18x128xf32, #tpu.memory_space<vmem>>, vector<2x1x128xf32>,
    %12 = vector.shape_cast %8 : vector<32x128xf32> to vector<2x16x128xf32>
    %c0_13 = arith.constant 0 : index
    %c1 = arith.constant 1 : index
    %c0_14 = arith.constant 0 : index
    %13 = vector.load %arg10[%c0_13, %c1, %c0_14] : memref<2x18x128xf32, #tpu.memory_space<vmem>>, vector<2x16x128xf32>
    tpu.vector_store %arg10[%c0_13, %c1, %c0_14], %12 {strides = array<i32>} : memref<2x18x128xf32, #tpu.memory_space<vmem>>, vector<2x16x128xf32>,
    %c0_15 = arith.constant 0 : index
    %c0_16 = arith.constant 0 : index
    %14 = vector.load %arg5[%c0_15, %c0_16] : memref<1x128xf32, #tpu.memory_space<vmem>>, vector<1x128xf32>
    %c0_17 = arith.constant 0 : index
    %c0_18 = arith.constant 0 : index
    %c0_19 = arith.constant 0 : index
    %15 = vector.load %arg10[%c0_17, %c0_18, %c0_19] : memref<2x18x128xf32, #tpu.memory_space<vmem>>, vector<2x16x128xf32>
    %16 = vector.shape_cast %15 : vector<2x16x128xf32> to vector<32x128xf32>
    %c0_20 = arith.constant 0 : index
    %c0_21 = arith.constant 0 : index
    %c0_22 = arith.constant 0 : index
    %17 = vector.load %arg4[%c0_20, %c0_21, %c0_22] : memref<3x128x128xf32, #tpu.memory_space<vmem>>, vector<1x128x128xf32>
    %18 = vector.shape_cast %17 : vector<1x128x128xf32> to vector<128x128xf32>
    %cst_23 = arith.constant dense<0.000000e+00> : vector<32x128xf32>
    %19 = tpu.matmul %16, %18, %cst_23 {dimension_numbers = #tpu.dot_dimension_numbers<[1], [0], [0], [1], [0, 0, 1, 1], [], []>} : vector<32x128xf32>, vector<128x128xf32>, vector<32x128xf32> -> vector<32x128xf32>
    %20 = vector.broadcast %14 : vector<1x128xf32> to vector<32x128xf32>
    %21 = arith.addf %20, %19 : vector<32x128xf32>
    %c0_24 = arith.constant 0 : index
    %c1_25 = arith.constant 1 : index
    %c0_26 = arith.constant 0 : index
    %22 = vector.load %arg10[%c0_24, %c1_25, %c0_26] : memref<2x18x128xf32, #tpu.memory_space<vmem>>, vector<2x16x128xf32>
    %23 = vector.shape_cast %22 : vector<2x16x128xf32> to vector<32x128xf32>
    %c1_27 = arith.constant 1 : index
    %c0_28 = arith.constant 0 : index
    %c0_29 = arith.constant 0 : index
    %24 = vector.load %arg4[%c1_27, %c0_28, %c0_29] : memref<3x128x128xf32, #tpu.memory_space<vmem>>, vector<1x128x128xf32>
    %25 = vector.shape_cast %24 : vector<1x128x128xf32> to vector<128x128xf32>
    %cst_30 = arith.constant dense<0.000000e+00> : vector<32x128xf32>
    %26 = tpu.matmul %23, %25, %cst_30 {dimension_numbers = #tpu.dot_dimension_numbers<[1], [0], [0], [1], [0, 0, 1, 1], [], []>} : vector<32x128xf32>, vector<128x128xf32>, vector<32x128xf32> -> vector<32x128xf32>
    %27 = arith.addf %21, %26 : vector<32x128xf32>
    %c0_31 = arith.constant 0 : index
    %c2 = arith.constant 2 : index
    %c0_32 = arith.constant 0 : index
    %28 = vector.load %arg10[%c0_31, %c2, %c0_32] : memref<2x18x128xf32, #tpu.memory_space<vmem>>, vector<2x16x128xf32>
    %29 = vector.shape_cast %28 : vector<2x16x128xf32> to vector<32x128xf32>
    %c2_33 = arith.constant 2 : index
    %c0_34 = arith.constant 0 : index
    %c0_35 = arith.constant 0 : index
    %30 = vector.load %arg4[%c2_33, %c0_34, %c0_35] : memref<3x128x128xf32, #tpu.memory_space<vmem>>, vector<1x128x128xf32>
    %31 = vector.shape_cast %30 : vector<1x128x128xf32> to vector<128x128xf32>
    %cst_36 = arith.constant dense<0.000000e+00> : vector<32x128xf32>
    %32 = tpu.matmul %29, %31, %cst_36 {dimension_numbers = #tpu.dot_dimension_numbers<[1], [0], [0], [1], [0, 0, 1, 1], [], []>} : vector<32x128xf32>, vector<128x128xf32>, vector<32x128xf32> -> vector<32x128xf32>
    %33 = arith.addf %27, %32 : vector<32x128xf32>
    %c0_37 = arith.constant 0 : index
    %c0_38 = arith.constant 0 : index
    %34 = vector.load %arg6[%c0_37, %c0_38] : memref<128x256xf32, #tpu.memory_space<vmem>>, vector<128x256xf32>
    %cst_39 = arith.constant dense<0.000000e+00> : vector<32x256xf32>
    %35 = tpu.matmul %33, %34, %cst_39 {dimension_numbers = #tpu.dot_dimension_numbers<[1], [0], [0], [1], [0, 0, 1, 1], [], []>} : vector<32x128xf32>, vector<128x256xf32>, vector<32x256xf32> -> vector<32x256xf32>
    %c0_40 = arith.constant 0 : index
    %c0_41 = arith.constant 0 : index
    %36 = vector.load %arg7[%c0_40, %c0_41] : memref<1x256xf32, #tpu.memory_space<vmem>>, vector<1x256xf32>
    %37 = vector.broadcast %36 : vector<1x256xf32> to vector<32x256xf32>
    %38 = arith.addf %35, %37 : vector<32x256xf32>
    %cst_42 = arith.constant 0.000000e+00 : f32
    %39 = vector.broadcast %cst_42 : f32 to vector<32x256xf32>
    %40 = arith.maximumf %38, %39 : vector<32x256xf32>
    %c0_43 = arith.constant 0 : index
    %c0_44 = arith.constant 0 : index
    %41 = vector.load %arg8[%c0_43, %c0_44] : memref<256x256xf32, #tpu.memory_space<vmem>>, vector<256x256xf32>
    %cst_45 = arith.constant dense<0.000000e+00> : vector<32x256xf32>
    %42 = tpu.matmul %1, %41, %cst_45 {dimension_numbers = #tpu.dot_dimension_numbers<[1], [0], [0], [1], [0, 0, 1, 1], [], []>} : vector<32x256xf32>, vector<256x256xf32>, vector<32x256xf32> -> vector<32x256xf32>
    %43 = arith.addf %40, %42 : vector<32x256xf32>
    %44 = vector.shape_cast %43 : vector<32x256xf32> to vector<2x16x256xf32>
    %c0_46 = arith.constant 0 : index
    %c0_47 = arith.constant 0 : index
    %c0_48 = arith.constant 0 : index
    %45 = vector.load %arg9[%c0_46, %c0_47, %c0_48] : memref<2x16x256xf32, #tpu.memory_space<vmem>>, vector<2x16x256xf32>
    tpu.vector_store %arg9[%c0_46, %c0_47, %c0_48], %44 {strides = array<i32>} : memref<2x16x256xf32, #tpu.memory_space<vmem>>, vector<2x16x256xf32>,
    return
  }
  func.func @transform_0(%arg0: i32) -> (i32, i32, i32) {
    %c0_i32 = arith.constant 0 : i32
    %c0_i32_0 = arith.constant 0 : i32
    %c0_i32_1 = arith.constant 0 : i32
    return %arg0, %c0_i32, %c0_i32_0 : i32, i32, i32
  }
  func.func @transform_1(%arg0: i32) -> (i32, i32) {
    %c0_i32 = arith.constant 0 : i32
    %c0_i32_0 = arith.constant 0 : i32
    %c0_i32_1 = arith.constant 0 : i32
    return %c0_i32, %c0_i32_0 : i32, i32
  }
  func.func @transform_2(%arg0: i32) -> (i32, i32) {
    %c0_i32 = arith.constant 0 : i32
    %c0_i32_0 = arith.constant 0 : i32
    %c0_i32_1 = arith.constant 0 : i32
    return %c0_i32, %c0_i32_0 : i32, i32
  }
  func.func @transform_3(%arg0: i32) -> (i32, i32, i32) {
    %c0_i32 = arith.constant 0 : i32
    %c0_i32_0 = arith.constant 0 : i32
    %c0_i32_1 = arith.constant 0 : i32
    %c0_i32_2 = arith.constant 0 : i32
    return %c0_i32, %c0_i32_0, %c0_i32_1 : i32, i32, i32
  }
  func.func @transform_4(%arg0: i32) -> (i32, i32) {
    %c0_i32 = arith.constant 0 : i32
    %c0_i32_0 = arith.constant 0 : i32
    %c0_i32_1 = arith.constant 0 : i32
    return %c0_i32, %c0_i32_0 : i32, i32
  }
  func.func @transform_5(%arg0: i32) -> (i32, i32) {
    %c0_i32 = arith.constant 0 : i32
    %c0_i32_0 = arith.constant 0 : i32
    %c0_i32_1 = arith.constant 0 : i32
    return %c0_i32, %c0_i32_0 : i32, i32
  }
  func.func @transform_6(%arg0: i32) -> (i32, i32) {
    %c0_i32 = arith.constant 0 : i32
    %c0_i32_0 = arith.constant 0 : i32
    %c0_i32_1 = arith.constant 0 : i32
    return %c0_i32, %c0_i32_0 : i32, i32
  }
  func.func @transform_7(%arg0: i32) -> (i32, i32) {
    %c0_i32 = arith.constant 0 : i32
    %c0_i32_0 = arith.constant 0 : i32
    %c0_i32_1 = arith.constant 0 : i32
    return %c0_i32, %c0_i32_0 : i32, i32
  }
  func.func @transform_8(%arg0: i32) -> (i32, i32, i32) {
    %c0_i32 = arith.constant 0 : i32
    %c0_i32_0 = arith.constant 0 : i32
    %c0_i32_1 = arith.constant 0 : i32
    return %arg0, %c0_i32, %c0_i32_0 : i32, i32, i32
  }
}

</mosaic_0001>

<llo_original>
// kernel: inverted_residual_forward.1
$region0: #{inverted_residual_forward.1}
  #allocation0 [shape = 'u32[]', space=smem, size = 0x4, offset = 0x4, fixed_abs, tag = 'smem constant byte address 0x4 - core index']
  #allocation1 [shape = 'u32[72,128]{1,0:T(1,128)}', space=vmem, size = 0x9000, scoped, tag = 'internal scratch']
  #allocation2 [shape = 'f32[2,18,128]{2,1,0:T(8,128)}', space=vmem, size = 0x6000, scoped, tag = 'scratch operand']
  %s0 = inlined_call_operand.vmem [shape: f32[2,16,256], index: 0, kind: input, shape index: {}]
  %s1 = inlined_call_operand.vmem [shape: f32[256,128], index: 1, kind: input, shape index: {}]
  %s2 = inlined_call_operand.vmem [shape: f32[1,128], index: 2, kind: input, shape index: {}]
  %s3 = inlined_call_operand.vmem [shape: f32[3,128,128], index: 3, kind: input, shape index: {}]
  %s4 = inlined_call_operand.vmem [shape: f32[1,128], index: 4, kind: input, shape index: {}]
  %s5 = inlined_call_operand.vmem [shape: f32[128,256], index: 5, kind: input, shape index: {}]
  %s6 = inlined_call_operand.vmem [shape: f32[1,256], index: 6, kind: input, shape index: {}]
  %s7 = inlined_call_operand.vmem [shape: f32[256,256], index: 7, kind: input, shape index: {}]
  %s8 = inlined_call_operand.vmem [shape: f32[2,16,256], index: 8, kind: output, shape index: {}]
  %s9 = sld [smem:[#allocation0]]
  $region42: #{inverted_residual_forward.1} parent=0
    _
  %s11 = ssub.s32 1, %s9
  %s12 = scalar_select 0, %s11, %s9
  // Predicated region
  $region2: #{inverted_residual_forward.1} parent=0 // pred_check
    _
  $region3: #{inverted_residual_forward.1} parent=0 // pred_check_branch
    %14 = sbr.rel (0) target = $region5
  $region4: #{inverted_residual_forward.1} parent=0 // pred_region
    _
  $region5: #{inverted_residual_forward.1} parent=0 // pred_fallthru
    _
  // Predicated region
  $region6: #{inverted_residual_forward.1} parent=0 // pred_check
    _
  $region7: #{inverted_residual_forward.1} parent=0 // pred_check_branch
    %16 = sbr.rel (0) target = $region9
  $region8: #{inverted_residual_forward.1} parent=0 // pred_region
    _
  $region9: #{inverted_residual_forward.1} parent=0 // pred_fallthru
    _
  // Predicated region
  $region10: #{inverted_residual_forward.1} parent=0 // pred_check
    _
  $region11: #{inverted_residual_forward.1} parent=0 // pred_check_branch
    %18 = sbr.rel (0) target = $region13
  $region12: #{inverted_residual_forward.1} parent=0 // pred_region
    _
  $region13: #{inverted_residual_forward.1} parent=0 // pred_fallthru
    _
  // Predicated region
  $region14: #{inverted_residual_forward.1} parent=0 // pred_check
    _
  $region15: #{inverted_residual_forward.1} parent=0 // pred_check_branch
    %20 = sbr.rel (0) target = $region17
  $region16: #{inverted_residual_forward.1} parent=0 // pred_region
    _
  $region17: #{inverted_residual_forward.1} parent=0 // pred_fallthru
    _
  // Predicated region
  $region18: #{inverted_residual_forward.1} parent=0 // pred_check
    _
  $region19: #{inverted_residual_forward.1} parent=0 // pred_check_branch
    %22 = sbr.rel (0) target = $region21
  $region20: #{inverted_residual_forward.1} parent=0 // pred_region
    _
  $region21: #{inverted_residual_forward.1} parent=0 // pred_fallthru
    _
  // Predicated region
  $region22: #{inverted_residual_forward.1} parent=0 // pred_check
    _
  $region23: #{inverted_residual_forward.1} parent=0 // pred_check_branch
    %24 = sbr.rel (0) target = $region25
  $region24: #{inverted_residual_forward.1} parent=0 // pred_region
    _
  $region25: #{inverted_residual_forward.1} parent=0 // pred_fallthru
    _
  // Predicated region
  $region26: #{inverted_residual_forward.1} parent=0 // pred_check
    _
  $region27: #{inverted_residual_forward.1} parent=0 // pred_check_branch
    %26 = sbr.rel (0) target = $region29
  $region28: #{inverted_residual_forward.1} parent=0 // pred_region
    _
  $region29: #{inverted_residual_forward.1} parent=0 // pred_fallthru
    _
  // Predicated region
  $region30: #{inverted_residual_forward.1} parent=0 // pred_check
    _
  $region31: #{inverted_residual_forward.1} parent=0 // pred_check_branch
    %28 = sbr.rel (0) target = $region33
  $region32: #{inverted_residual_forward.1} parent=0 // pred_region
    _
  $region33: #{inverted_residual_forward.1} parent=0 // pred_fallthru
    _
  %v29 = vld [vmem:[%s0] sm:$0xff]
  %v30 = vld [vmem:[%s0 + $0x8] sm:$0xff]
  %v31 = vld [vmem:[%s0 + $0x10] sm:$0xff]
  %v32 = vld [vmem:[%s0 + $0x18] sm:$0xff]
  %v33 = vld [vmem:[%s0 + $0x20] sm:$0xff]
  %v34 = vld [vmem:[%s0 + $0x28] sm:$0xff]
  %v35 = vld [vmem:[%s0 + $0x30] sm:$0xff]
  %v36 = vld [vmem:[%s0 + $0x38] sm:$0xff]
  %v37 = vld [vmem:[%s1] sm:$0xff]
  %v38 = vld [vmem:[%s1 + $0x8] sm:$0xff]
  %v39 = vld [vmem:[%s1 + $0x10] sm:$0xff]
  %v40 = vld [vmem:[%s1 + $0x18] sm:$0xff]
  %v41 = vld [vmem:[%s1 + $0x20] sm:$0xff]
  %v42 = vld [vmem:[%s1 + $0x28] sm:$0xff]
  %v43 = vld [vmem:[%s1 + $0x30] sm:$0xff]
  %v44 = vld [vmem:[%s1 + $0x38] sm:$0xff]
  %v45 = vld [vmem:[%s1 + $0x40] sm:$0xff]
  %v46 = vld [vmem:[%s1 + $0x48] sm:$0xff]
  %v47 = vld [vmem:[%s1 + $0x50] sm:$0xff]
  %v48 = vld [vmem:[%s1 + $0x58] sm:$0xff]
  %v49 = vld [vmem:[%s1 + $0x60] sm:$0xff]
  %v50 = vld [vmem:[%s1 + $0x68] sm:$0xff]
  %v51 = vld [vmem:[%s1 + $0x70] sm:$0xff]
  %v52 = vld [vmem:[%s1 + $0x78] sm:$0xff]
  %v53 = vld [vmem:[%s1 + $0x80] sm:$0xff]
  %v54 = vld [vmem:[%s1 + $0x88] sm:$0xff]
  %v55 = vld [vmem:[%s1 + $0x90] sm:$0xff]
  %v56 = vld [vmem:[%s1 + $0x98] sm:$0xff]
  %v57 = vld [vmem:[%s1 + $0xa0] sm:$0xff]
  %v58 = vld [vmem:[%s1 + $0xa8] sm:$0xff]
  %v59 = vld [vmem:[%s1 + $0xb0] sm:$0xff]
  %v60 = vld [vmem:[%s1 + $0xb8] sm:$0xff]
  %v61 = vld [vmem:[%s1 + $0xc0] sm:$0xff]
  %v62 = vld [vmem:[%s1 + $0xc8] sm:$0xff]
  %v63 = vld [vmem:[%s1 + $0xd0] sm:$0xff]
  %v64 = vld [vmem:[%s1 + $0xd8] sm:$0xff]
  %v65 = vld [vmem:[%s1 + $0xe0] sm:$0xff]
  %v66 = vld [vmem:[%s1 + $0xe8] sm:$0xff]
  %v67 = vld [vmem:[%s1 + $0xf0] sm:$0xff]
  %v68 = vld [vmem:[%s1 + $0xf8] sm:$0xff]
  %v69 = vld [vmem:[%s2] sm:$0x1]
  %v71 = vperm.slane %v69, 0
  %73 = vmatpush.msra.mxu0 %v52
  %74 = vmatpush.msra.mxu0 %v51
  %75 = vmatpush.msra.mxu0 %v50
  %76 = vmatpush.msra.mxu0 %v49
  %77 = vmatpush.msra.mxu0 %v48
  %78 = vmatpush.msra.mxu0 %v47
  %79 = vmatpush.msra.mxu0 %v46
  %80 = vmatpush.msra.mxu0 %v45
  %81 = vmatpush.msra.mxu0 %v44
  %82 = vmatpush.msra.mxu0 %v43
  %83 = vmatpush.msra.mxu0 %v42
  %84 = vmatpush.msra.mxu0 %v41
  %85 = vmatpush.msra.mxu0 %v40
  %86 = vmatpush.msra.mxu0 %v39
  %87 = vmatpush.msra.mxu0 %v38
  %88 = vmatpush.msra.mxu0 %v37
  %89 = vmatmul.f32.gmra.mxu0 %v29
  %v90 = vpop.f32.mrf.mxu0
  %v91 = vadd.f32 %v71, %v90
  %92 = vmatmul.f32.gmra.mxu0 %v31
  %v93 = vpop.f32.mrf.mxu0
  %v94 = vadd.f32 %v71, %v93
  %95 = vmatmul.f32.gmra.mxu0 %v33
  %v96 = vpop.f32.mrf.mxu0
  %v97 = vadd.f32 %v71, %v96
  %98 = vmatmul.f32.gmra.mxu0 %v35
  %v99 = vpop.f32.mrf.mxu0
  %v100 = vadd.f32 %v71, %v99
  %101 = vdwg.mxu0
  %102 = vmatpush.msra.mxu0 %v68
  %103 = vmatpush.msra.mxu0 %v67
  %104 = vmatpush.msra.mxu0 %v66
  %105 = vmatpush.msra.mxu0 %v65
  %106 = vmatpush.msra.mxu0 %v64
  %107 = vmatpush.msra.mxu0 %v63
  %108 = vmatpush.msra.mxu0 %v62
  %109 = vmatpush.msra.mxu0 %v61
  %110 = vmatpush.msra.mxu0 %v60
  %111 = vmatpush.msra.mxu0 %v59
  %112 = vmatpush.msra.mxu0 %v58
  %113 = vmatpush.msra.mxu0 %v57
  %114 = vmatpush.msra.mxu0 %v56
  %115 = vmatpush.msra.mxu0 %v55
  %116 = vmatpush.msra.mxu0 %v54
  %117 = vmatpush.msra.mxu0 %v53
  %118 = vmatmul.f32.gmra.mxu0 %v30
  %v119 = vpop.f32.mrf.mxu0
  %v120 = vadd.f32 %v91, %v119
  %121 = vmatmul.f32.gmra.mxu0 %v32
  %v122 = vpop.f32.mrf.mxu0
  %v123 = vadd.f32 %v94, %v122
  %124 = vmatmul.f32.gmra.mxu0 %v34
  %v125 = vpop.f32.mrf.mxu0
  %v126 = vadd.f32 %v97, %v125
  %127 = vmatmul.f32.gmra.mxu0 %v36
  %v128 = vpop.f32.mrf.mxu0
  %v129 = vadd.f32 %v100, %v128
  %130 = vdwg.mxu0
  %v131 = vmax.f32 %v120, 0.0
  %v132 = vmax.f32 %v123, 0.0
  %v133 = vmax.f32 %v126, 0.0
  %v134 = vmax.f32 %v129, 0.0
  %135 = vst [vmem:[#allocation2] sm:$0x1] 0.0
  %136 = vst [vmem:[#allocation2 + $0x18] sm:$0x1] 0.0
  %137 = vst [vmem:[#allocation2 + $0x11] sm:$0x1] 0.0
  %138 = vst [vmem:[#allocation2 + $0x29] sm:$0x1] 0.0
  %139 = vst [vmem:[#allocation2 + $0x1] sm:$0xff] %v131
  %140 = vst [vmem:[#allocation2 + $0x9] sm:$0xff] %v132
  %141 = vst [vmem:[#allocation2 + $0x19] sm:$0xff] %v133
  %142 = vst [vmem:[#allocation2 + $0x21] sm:$0xff] %v134
  %v143 = vld [vmem:[%s4] sm:$0x1]
  %v144 = vld [vmem:[#allocation2] sm:$0xff]
  %v145 = vld [vmem:[#allocation2 + $0x8] sm:$0xff]
  %v146 = vld [vmem:[#allocation2 + $0x18] sm:$0xff]
  %v147 = vld [vmem:[#allocation2 + $0x20] sm:$0xff]
  %v148 = vld [vmem:[%s3] sm:$0xff]
  %v149 = vld [vmem:[%s3 + $0x8] sm:$0xff]
  %v150 = vld [vmem:[%s3 + $0x10] sm:$0xff]
  %v151 = vld [vmem:[%s3 + $0x18] sm:$0xff]
  %v152 = vld [vmem:[%s3 + $0x20] sm:$0xff]
  %v153 = vld [vmem:[%s3 + $0x28] sm:$0xff]
  %v154 = vld [vmem:[%s3 + $0x30] sm:$0xff]
  %v155 = vld [vmem:[%s3 + $0x38] sm:$0xff]
  %v156 = vld [vmem:[%s3 + $0x40] sm:$0xff]
  %v157 = vld [vmem:[%s3 + $0x48] sm:$0xff]
  %v158 = vld [vmem:[%s3 + $0x50] sm:$0xff]
  %v159 = vld [vmem:[%s3 + $0x58] sm:$0xff]
  %v160 = vld [vmem:[%s3 + $0x60] sm:$0xff]
  %v161 = vld [vmem:[%s3 + $0x68] sm:$0xff]
  %v162 = vld [vmem:[%s3 + $0x70] sm:$0xff]
  %v163 = vld [vmem:[%s3 + $0x78] sm:$0xff]
  %164 = vmatpush.msra.mxu0 %v163
  %165 = vmatpush.msra.mxu0 %v162
  %166 = vmatpush.msra.mxu0 %v161
  %167 = vmatpush.msra.mxu0 %v160
  %168 = vmatpush.msra.mxu0 %v159
  %169 = vmatpush.msra.mxu0 %v158
  %170 = vmatpush.msra.mxu0 %v157
  %171 = vmatpush.msra.mxu0 %v156
  %172 = vmatpush.msra.mxu0 %v155
  %173 = vmatpush.msra.mxu0 %v154
  %174 = vmatpush.msra.mxu0 %v153
  %175 = vmatpush.msra.mxu0 %v152
  %176 = vmatpush.msra.mxu0 %v151
  %177 = vmatpush.msra.mxu0 %v150
  %178 = vmatpush.msra.mxu0 %v149
  %179 = vmatpush.msra.mxu0 %v148
  %180 = vmatmul.f32.gmra.mxu0 %v144
  %v181 = vpop.f32.mrf.mxu0
  %v182 = vadd.f32 0.0, %v181
  %183 = vmatmul.f32.gmra.mxu0 %v145
  %v184 = vpop.f32.mrf.mxu0
  %v185 = vadd.f32 0.0, %v184
  %186 = vmatmul.f32.gmra.mxu0 %v146
  %v187 = vpop.f32.mrf.mxu0
  %v188 = vadd.f32 0.0, %v187
  %189 = vmatmul.f32.gmra.mxu0 %v147
  %v190 = vpop.f32.mrf.mxu0
  %v191 = vadd.f32 0.0, %v190
  %192 = vdwg.mxu0
  %v194 = vperm.slane %v143, 0
  %v196 = vadd.f32 %v194, %v182
  %v197 = vadd.f32 %v194, %v185
  %v198 = vadd.f32 %v194, %v188
  %v199 = vadd.f32 %v194, %v191
  %v200 = vld [vmem:[#allocation2 + $0x1] sm:$0xff]
  %v201 = vld [vmem:[#allocation2 + $0x9] sm:$0xff]
  %v202 = vld [vmem:[#allocation2 + $0x19] sm:$0xff]
  %v203 = vld [vmem:[#allocation2 + $0x21] sm:$0xff]
  %s204 = scalar_lea.vmem %s3, 128
  %v205 = vld [vmem:[%s204] sm:$0xff]
  %v206 = vld [vmem:[%s204 + $0x8] sm:$0xff]
  %v207 = vld [vmem:[%s204 + $0x10] sm:$0xff]
  %v208 = vld [vmem:[%s204 + $0x18] sm:$0xff]
  %v209 = vld [vmem:[%s204 + $0x20] sm:$0xff]
  %v210 = vld [vmem:[%s204 + $0x28] sm:$0xff]
  %v211 = vld [vmem:[%s204 + $0x30] sm:$0xff]
  %v212 = vld [vmem:[%s204 + $0x38] sm:$0xff]
  %v213 = vld [vmem:[%s204 + $0x40] sm:$0xff]
  %v214 = vld [vmem:[%s204 + $0x48] sm:$0xff]
  %v215 = vld [vmem:[%s204 + $0x50] sm:$0xff]
  %v216 = vld [vmem:[%s204 + $0x58] sm:$0xff]
  %v217 = vld [vmem:[%s204 + $0x60] sm:$0xff]
  %v218 = vld [vmem:[%s204 + $0x68] sm:$0xff]
  %v219 = vld [vmem:[%s204 + $0x70] sm:$0xff]
  %v220 = vld [vmem:[%s204 + $0x78] sm:$0xff]
  %221 = vmatpush.msra.mxu0 %v220
  %222 = vmatpush.msra.mxu0 %v219
  %223 = vmatpush.msra.mxu0 %v218
  %224 = vmatpush.msra.mxu0 %v217
  %225 = vmatpush.msra.mxu0 %v216
  %226 = vmatpush.msra.mxu0 %v215
  %227 = vmatpush.msra.mxu0 %v214
  %228 = vmatpush.msra.mxu0 %v213
  %229 = vmatpush.msra.mxu0 %v212
  %230 = vmatpush.msra.mxu0 %v211
  %231 = vmatpush.msra.mxu0 %v210
  %232 = vmatpush.msra.mxu0 %v209
  %233 = vmatpush.msra.mxu0 %v208
  %234 = vmatpush.msra.mxu0 %v207
  %235 = vmatpush.msra.mxu0 %v206
  %236 = vmatpush.msra.mxu0 %v205
  %237 = vmatmul.f32.gmra.mxu0 %v200
  %v238 = vpop.f32.mrf.mxu0
  %v239 = vadd.f32 0.0, %v238
  %240 = vmatmul.f32.gmra.mxu0 %v201
  %v241 = vpop.f32.mrf.mxu0
  %v242 = vadd.f32 0.0, %v241
  %243 = vmatmul.f32.gmra.mxu0 %v202
  %v244 = vpop.f32.mrf.mxu0
  %v245 = vadd.f32 0.0, %v244
  %246 = vmatmul.f32.gmra.mxu0 %v203
  %v247 = vpop.f32.mrf.mxu0
  %v248 = vadd.f32 0.0, %v247
  %249 = vdwg.mxu0
  %v250 = vadd.f32 %v196, %v239
  %v251 = vadd.f32 %v197, %v242
  %v252 = vadd.f32 %v198, %v245
  %v253 = vadd.f32 %v199, %v248
  %v254 = vld [vmem:[#allocation2 + $0x2] sm:$0xff]
  %v255 = vld [vmem:[#allocation2 + $0xa] sm:$0xff]
  %v256 = vld [vmem:[#allocation2 + $0x1a] sm:$0xff]
  %v257 = vld [vmem:[#allocation2 + $0x22] sm:$0xff]
  %s258 = scalar_lea.vmem %s3, 256
  %v259 = vld [vmem:[%s258] sm:$0xff]
  %v260 = vld [vmem:[%s258 + $0x8] sm:$0xff]
  %v261 = vld [vmem:[%s258 + $0x10] sm:$0xff]
  %v262 = vld [vmem:[%s258 + $0x18] sm:$0xff]
  %v263 = vld [vmem:[%s258 + $0x20] sm:$0xff]
  %v264 = vld [vmem:[%s258 + $0x28] sm:$0xff]
  %v265 = vld [vmem:[%s258 + $0x30] sm:$0xff]
  %v266 = vld [vmem:[%s258 + $0x38] sm:$0xff]
  %v267 = vld [vmem:[%s258 + $0x40] sm:$0xff]
  %v268 = vld [vmem:[%s258 + $0x48] sm:$0xff]
  %v269 = vld [vmem:[%s258 + $0x50] sm:$0xff]
  %v270 = vld [vmem:[%s258 + $0x58] sm:$0xff]
  %v271 = vld [vmem:[%s258 + $0x60] sm:$0xff]
  %v272 = vld [vmem:[%s258 + $0x68] sm:$0xff]
  %v273 = vld [vmem:[%s258 + $0x70] sm:$0xff]
  %v274 = vld [vmem:[%s258 + $0x78] sm:$0xff]
  %275 = vmatpush.msra.mxu0 %v274
  %276 = vmatpush.msra.mxu0 %v273
  %277 = vmatpush.msra.mxu0 %v272
  %278 = vmatpush.msra.mxu0 %v271
  %279 = vmatpush.msra.mxu0 %v270
  %280 = vmatpush.msra.mxu0 %v269
  %281 = vmatpush.msra.mxu0 %v268
  %282 = vmatpush.msra.mxu0 %v267
  %283 = vmatpush.msra.mxu0 %v266
  %284 = vmatpush.msra.mxu0 %v265
  %285 = vmatpush.msra.mxu0 %v264
  %286 = vmatpush.msra.mxu0 %v263
  %287 = vmatpush.msra.mxu0 %v262
  %288 = vmatpush.msra.mxu0 %v261
  %289 = vmatpush.msra.mxu0 %v260
  %290 = vmatpush.msra.mxu0 %v259
  %291 = vmatmul.f32.gmra.mxu0 %v254
  %v292 = vpop.f32.mrf.mxu0
  %v293 = vadd.f32 0.0, %v292
  %294 = vmatmul.f32.gmra.mxu0 %v255
  %v295 = vpop.f32.mrf.mxu0
  %v296 = vadd.f32 0.0, %v295
  %297 = vmatmul.f32.gmra.mxu0 %v256
  %v298 = vpop.f32.mrf.mxu0
  %v299 = vadd.f32 0.0, %v298
  %300 = vmatmul.f32.gmra.mxu0 %v257
  %v301 = vpop.f32.mrf.mxu0
  %v302 = vadd.f32 0.0, %v301
  %303 = vdwg.mxu0
  %v304 = vadd.f32 %v250, %v293
  %v305 = vadd.f32 %v251, %v296
  %v306 = vadd.f32 %v252, %v299
  %v307 = vadd.f32 %v253, %v302
  %v308 = vld [vmem:[%s5] sm:$0xff]
  %v309 = vld [vmem:[%s5 + $0x8] sm:$0xff]
  %v310 = vld [vmem:[%s5 + $0x10] sm:$0xff]
  %v311 = vld [vmem:[%s5 + $0x18] sm:$0xff]
  %v312 = vld [vmem:[%s5 + $0x20] sm:$0xff]
  %v313 = vld [vmem:[%s5 + $0x28] sm:$0xff]
  %v314 = vld [vmem:[%s5 + $0x30] sm:$0xff]
  %v315 = vld [vmem:[%s5 + $0x38] sm:$0xff]
  %v316 = vld [vmem:[%s5 + $0x40] sm:$0xff]
  %v317 = vld [vmem:[%s5 + $0x48] sm:$0xff]
  %v318 = vld [vmem:[%s5 + $0x50] sm:$0xff]
  %v319 = vld [vmem:[%s5 + $0x58] sm:$0xff]
  %v320 = vld [vmem:[%s5 + $0x60] sm:$0xff]
  %v321 = vld [vmem:[%s5 + $0x68] sm:$0xff]
  %v322 = vld [vmem:[%s5 + $0x70] sm:$0xff]
  %v323 = vld [vmem:[%s5 + $0x78] sm:$0xff]
  %v324 = vld [vmem:[%s5 + $0x80] sm:$0xff]
  %v325 = vld [vmem:[%s5 + $0x88] sm:$0xff]
  %v326 = vld [vmem:[%s5 + $0x90] sm:$0xff]
  %v327 = vld [vmem:[%s5 + $0x98] sm:$0xff]
  %v328 = vld [vmem:[%s5 + $0xa0] sm:$0xff]
  %v329 = vld [vmem:[%s5 + $0xa8] sm:$0xff]
  %v330 = vld [vmem:[%s5 + $0xb0] sm:$0xff]
  %v331 = vld [vmem:[%s5 + $0xb8] sm:$0xff]
  %v332 = vld [vmem:[%s5 + $0xc0] sm:$0xff]
  %v333 = vld [vmem:[%s5 + $0xc8] sm:$0xff]
  %v334 = vld [vmem:[%s5 + $0xd0] sm:$0xff]
  %v335 = vld [vmem:[%s5 + $0xd8] sm:$0xff]
  %v336 = vld [vmem:[%s5 + $0xe0] sm:$0xff]
  %v337 = vld [vmem:[%s5 + $0xe8] sm:$0xff]
  %v338 = vld [vmem:[%s5 + $0xf0] sm:$0xff]
  %v339 = vld [vmem:[%s5 + $0xf8] sm:$0xff]
  %v340 = vld [vmem:[%s6] sm:$0x3]
  %v342 = vperm.slane %v340, 0
  %v343 = vperm.slane %v340, 1
  %346 = vmatpush.msra.mxu0 %v338
  %347 = vmatpush.msra.mxu0 %v336
  %348 = vmatpush.msra.mxu0 %v334
  %349 = vmatpush.msra.mxu0 %v332
  %350 = vmatpush.msra.mxu0 %v330
  %351 = vmatpush.msra.mxu0 %v328
  %352 = vmatpush.msra.mxu0 %v326
  %353 = vmatpush.msra.mxu0 %v324
  %354 = vmatpush.msra.mxu0 %v322
  %355 = vmatpush.msra.mxu0 %v320
  %356 = vmatpush.msra.mxu0 %v318
  %357 = vmatpush.msra.mxu0 %v316
  %358 = vmatpush.msra.mxu0 %v314
  %359 = vmatpush.msra.mxu0 %v312
  %360 = vmatpush.msra.mxu0 %v310
  %361 = vmatpush.msra.mxu0 %v308
  %362 = vmatmul.f32.gmra.mxu0 %v304
  %v363 = vpop.f32.mrf.mxu0
  %v364 = vadd.f32 %v342, %v363
  %365 = vmatmul.f32.gmra.mxu0 %v305
  %v366 = vpop.f32.mrf.mxu0
  %v367 = vadd.f32 %v342, %v366
  %368 = vmatmul.f32.gmra.mxu0 %v306
  %v369 = vpop.f32.mrf.mxu0
  %v370 = vadd.f32 %v342, %v369
  %371 = vmatmul.f32.gmra.mxu0 %v307
  %v372 = vpop.f32.mrf.mxu0
  %v373 = vadd.f32 %v342, %v372
  %374 = vdwg.mxu0
  %375 = vmatpush.msra.mxu0 %v339
  %376 = vmatpush.msra.mxu0 %v337
  %377 = vmatpush.msra.mxu0 %v335
  %378 = vmatpush.msra.mxu0 %v333
  %379 = vmatpush.msra.mxu0 %v331
  %380 = vmatpush.msra.mxu0 %v329
  %381 = vmatpush.msra.mxu0 %v327
  %382 = vmatpush.msra.mxu0 %v325
  %383 = vmatpush.msra.mxu0 %v323
  %384 = vmatpush.msra.mxu0 %v321
  %385 = vmatpush.msra.mxu0 %v319
  %386 = vmatpush.msra.mxu0 %v317
  %387 = vmatpush.msra.mxu0 %v315
  %388 = vmatpush.msra.mxu0 %v313
  %389 = vmatpush.msra.mxu0 %v311
  %390 = vmatpush.msra.mxu0 %v309
  %391 = vmatmul.f32.gmra.mxu0 %v304
  %v392 = vpop.f32.mrf.mxu0
  %v393 = vadd.f32 %v343, %v392
  %394 = vmatmul.f32.gmra.mxu0 %v305
  %v395 = vpop.f32.mrf.mxu0
  %v396 = vadd.f32 %v343, %v395
  %397 = vmatmul.f32.gmra.mxu0 %v306
  %v398 = vpop.f32.mrf.mxu0
  %v399 = vadd.f32 %v343, %v398
  %400 = vmatmul.f32.gmra.mxu0 %v307
  %v401 = vpop.f32.mrf.mxu0
  %v402 = vadd.f32 %v343, %v401
  %403 = vdwg.mxu0
  %v404 = vmax.f32 %v364, 0.0
  %v405 = vmax.f32 %v393, 0.0
  %v406 = vmax.f32 %v367, 0.0
  %v407 = vmax.f32 %v396, 0.0
  %v408 = vmax.f32 %v370, 0.0
  %v409 = vmax.f32 %v399, 0.0
  %v410 = vmax.f32 %v373, 0.0
  %v411 = vmax.f32 %v402, 0.0
  %v412 = vld [vmem:[%s7] sm:$0xff]
  %v413 = vld [vmem:[%s7 + $0x8] sm:$0xff]
  %v414 = vld [vmem:[%s7 + $0x10] sm:$0xff]
  %v415 = vld [vmem:[%s7 + $0x18] sm:$0xff]
  %v416 = vld [vmem:[%s7 + $0x20] sm:$0xff]
  %v417 = vld [vmem:[%s7 + $0x28] sm:$0xff]
  %v418 = vld [vmem:[%s7 + $0x30] sm:$0xff]
  %v419 = vld [vmem:[%s7 + $0x38] sm:$0xff]
  %v420 = vld [vmem:[%s7 + $0x40] sm:$0xff]
  %v421 = vld [vmem:[%s7 + $0x48] sm:$0xff]
  %v422 = vld [vmem:[%s7 + $0x50] sm:$0xff]
  %v423 = vld [vmem:[%s7 + $0x58] sm:$0xff]
  %v424 = vld [vmem:[%s7 + $0x60] sm:$0xff]
  %v425 = vld [vmem:[%s7 + $0x68] sm:$0xff]
  %v426 = vld [vmem:[%s7 + $0x70] sm:$0xff]
  %v427 = vld [vmem:[%s7 + $0x78] sm:$0xff]
  %v428 = vld [vmem:[%s7 + $0x80] sm:$0xff]
  %v429 = vld [vmem:[%s7 + $0x88] sm:$0xff]
  %v430 = vld [vmem:[%s7 + $0x90] sm:$0xff]
  %v431 = vld [vmem:[%s7 + $0x98] sm:$0xff]
  %v432 = vld [vmem:[%s7 + $0xa0] sm:$0xff]
  %v433 = vld [vmem:[%s7 + $0xa8] sm:$0xff]
  %v434 = vld [vmem:[%s7 + $0xb0] sm:$0xff]
  %v435 = vld [vmem:[%s7 + $0xb8] sm:$0xff]
  %v436 = vld [vmem:[%s7 + $0xc0] sm:$0xff]
  %v437 = vld [vmem:[%s7 + $0xc8] sm:$0xff]
  %v438 = vld [vmem:[%s7 + $0xd0] sm:$0xff]
  %v439 = vld [vmem:[%s7 + $0xd8] sm:$0xff]
  %v440 = vld [vmem:[%s7 + $0xe0] sm:$0xff]
  %v441 = vld [vmem:[%s7 + $0xe8] sm:$0xff]
  %v442 = vld [vmem:[%s7 + $0xf0] sm:$0xff]
  %v443 = vld [vmem:[%s7 + $0xf8] sm:$0xff]
  %v444 = vld [vmem:[%s7 + $0x100] sm:$0xff]
  %v445 = vld [vmem:[%s7 + $0x108] sm:$0xff]
  %v446 = vld [vmem:[%s7 + $0x110] sm:$0xff]
  %v447 = vld [vmem:[%s7 + $0x118] sm:$0xff]
  %v448 = vld [vmem:[%s7 + $0x120] sm:$0xff]
  %v449 = vld [vmem:[%s7 + $0x128] sm:$0xff]
  %v450 = vld [vmem:[%s7 + $0x130] sm:$0xff]
  %v451 = vld [vmem:[%s7 + $0x138] sm:$0xff]
  %v452 = vld [vmem:[%s7 + $0x140] sm:$0xff]
  %v453 = vld [vmem:[%s7 + $0x148] sm:$0xff]
  %v454 = vld [vmem:[%s7 + $0x150] sm:$0xff]
  %v455 = vld [vmem:[%s7 + $0x158] sm:$0xff]
  %v456 = vld [vmem:[%s7 + $0x160] sm:$0xff]
  %v457 = vld [vmem:[%s7 + $0x168] sm:$0xff]
  %v458 = vld [vmem:[%s7 + $0x170] sm:$0xff]
  %v459 = vld [vmem:[%s7 + $0x178] sm:$0xff]
  %v460 = vld [vmem:[%s7 + $0x180] sm:$0xff]
  %v461 = vld [vmem:[%s7 + $0x188] sm:$0xff]
  %v462 = vld [vmem:[%s7 + $0x190] sm:$0xff]
  %v463 = vld [vmem:[%s7 + $0x198] sm:$0xff]
  %v464 = vld [vmem:[%s7 + $0x1a0] sm:$0xff]
  %v465 = vld [vmem:[%s7 + $0x1a8] sm:$0xff]
  %v466 = vld [vmem:[%s7 + $0x1b0] sm:$0xff]
  %v467 = vld [vmem:[%s7 + $0x1b8] sm:$0xff]
  %v468 = vld [vmem:[%s7 + $0x1c0] sm:$0xff]
  %v469 = vld [vmem:[%s7 + $0x1c8] sm:$0xff]
  %v470 = vld [vmem:[%s7 + $0x1d0] sm:$0xff]
  %v471 = vld [vmem:[%s7 + $0x1d8] sm:$0xff]
  %v472 = vld [vmem:[%s7 + $0x1e0] sm:$0xff]
  %v473 = vld [vmem:[%s7 + $0x1e8] sm:$0xff]
  %v474 = vld [vmem:[%s7 + $0x1f0] sm:$0xff]
  %v475 = vld [vmem:[%s7 + $0x1f8] sm:$0xff]
  %476 = vmatpush.msra.mxu0 %v442
  %477 = vmatpush.msra.mxu0 %v440
  %478 = vmatpush.msra.mxu0 %v438
  %479 = vmatpush.msra.mxu0 %v436
  %480 = vmatpush.msra.mxu0 %v434
  %481 = vmatpush.msra.mxu0 %v432
  %482 = vmatpush.msra.mxu0 %v430
  %483 = vmatpush.msra.mxu0 %v428
  %484 = vmatpush.msra.mxu0 %v426
  %485 = vmatpush.msra.mxu0 %v424
  %486 = vmatpush.msra.mxu0 %v422
  %487 = vmatpush.msra.mxu0 %v420
  %488 = vmatpush.msra.mxu0 %v418
  %489 = vmatpush.msra.mxu0 %v416
  %490 = vmatpush.msra.mxu0 %v414
  %491 = vmatpush.msra.mxu0 %v412
  %492 = vmatmul.f32.gmra.mxu0 %v29
  %v493 = vpop.f32.mrf.mxu0
  %v494 = vadd.f32 0.0, %v493
  %495 = vmatmul.f32.gmra.mxu0 %v31
  %v496 = vpop.f32.mrf.mxu0
  %v497 = vadd.f32 0.0, %v496
  %498 = vmatmul.f32.gmra.mxu0 %v33
  %v499 = vpop.f32.mrf.mxu0
  %v500 = vadd.f32 0.0, %v499
  %501 = vmatmul.f32.gmra.mxu0 %v35
  %v502 = vpop.f32.mrf.mxu0
  %v503 = vadd.f32 0.0, %v502
  %504 = vdwg.mxu0
  %505 = vmatpush.msra.mxu0 %v474
  %506 = vmatpush.msra.mxu0 %v472
  %507 = vmatpush.msra.mxu0 %v470
  %508 = vmatpush.msra.mxu0 %v468
  %509 = vmatpush.msra.mxu0 %v466
  %510 = vmatpush.msra.mxu0 %v464
  %511 = vmatpush.msra.mxu0 %v462
  %512 = vmatpush.msra.mxu0 %v460
  %513 = vmatpush.msra.mxu0 %v458
  %514 = vmatpush.msra.mxu0 %v456
  %515 = vmatpush.msra.mxu0 %v454
  %516 = vmatpush.msra.mxu0 %v452
  %517 = vmatpush.msra.mxu0 %v450
  %518 = vmatpush.msra.mxu0 %v448
  %519 = vmatpush.msra.mxu0 %v446
  %520 = vmatpush.msra.mxu0 %v444
  %521 = vmatmul.f32.gmra.mxu0 %v30
  %v522 = vpop.f32.mrf.mxu0
  %v523 = vadd.f32 %v494, %v522
  %524 = vmatmul.f32.gmra.mxu0 %v32
  %v525 = vpop.f32.mrf.mxu0
  %v526 = vadd.f32 %v497, %v525
  %527 = vmatmul.f32.gmra.mxu0 %v34
  %v528 = vpop.f32.mrf.mxu0
  %v529 = vadd.f32 %v500, %v528
  %530 = vmatmul.f32.gmra.mxu0 %v36
  %v531 = vpop.f32.mrf.mxu0
  %v532 = vadd.f32 %v503, %v531
  %533 = vdwg.mxu0
  %534 = vmatpush.msra.mxu0 %v443
  %535 = vmatpush.msra.mxu0 %v441
  %536 = vmatpush.msra.mxu0 %v439
  %537 = vmatpush.msra.mxu0 %v437
  %538 = vmatpush.msra.mxu0 %v435
  %539 = vmatpush.msra.mxu0 %v433
  %540 = vmatpush.msra.mxu0 %v431
  %541 = vmatpush.msra.mxu0 %v429
  %542 = vmatpush.msra.mxu0 %v427
  %543 = vmatpush.msra.mxu0 %v425
  %544 = vmatpush.msra.mxu0 %v423
  %545 = vmatpush.msra.mxu0 %v421
  %546 = vmatpush.msra.mxu0 %v419
  %547 = vmatpush.msra.mxu0 %v417
  %548 = vmatpush.msra.mxu0 %v415
  %549 = vmatpush.msra.mxu0 %v413
  %550 = vmatmul.f32.gmra.mxu0 %v29
  %v551 = vpop.f32.mrf.mxu0
  %v552 = vadd.f32 0.0, %v551
  %553 = vmatmul.f32.gmra.mxu0 %v31
  %v554 = vpop.f32.mrf.mxu0
  %v555 = vadd.f32 0.0, %v554
  %556 = vmatmul.f32.gmra.mxu0 %v33
  %v557 = vpop.f32.mrf.mxu0
  %v558 = vadd.f32 0.0, %v557
  %559 = vmatmul.f32.gmra.mxu0 %v35
  %v560 = vpop.f32.mrf.mxu0
  %v561 = vadd.f32 0.0, %v560
  %562 = vdwg.mxu0
  %563 = vmatpush.msra.mxu0 %v475
  %564 = vmatpush.msra.mxu0 %v473
  %565 = vmatpush.msra.mxu0 %v471
  %566 = vmatpush.msra.mxu0 %v469
  %567 = vmatpush.msra.mxu0 %v467
  %568 = vmatpush.msra.mxu0 %v465
  %569 = vmatpush.msra.mxu0 %v463
  %570 = vmatpush.msra.mxu0 %v461
  %571 = vmatpush.msra.mxu0 %v459
  %572 = vmatpush.msra.mxu0 %v457
  %573 = vmatpush.msra.mxu0 %v455
  %574 = vmatpush.msra.mxu0 %v453
  %575 = vmatpush.msra.mxu0 %v451
  %576 = vmatpush.msra.mxu0 %v449
  %577 = vmatpush.msra.mxu0 %v447
  %578 = vmatpush.msra.mxu0 %v445
  %579 = vmatmul.f32.gmra.mxu0 %v30
  %v580 = vpop.f32.mrf.mxu0
  %v581 = vadd.f32 %v552, %v580
  %582 = vmatmul.f32.gmra.mxu0 %v32
  %v583 = vpop.f32.mrf.mxu0
  %v584 = vadd.f32 %v555, %v583
  %585 = vmatmul.f32.gmra.mxu0 %v34
  %v586 = vpop.f32.mrf.mxu0
  %v587 = vadd.f32 %v558, %v586
  %588 = vmatmul.f32.gmra.mxu0 %v36
  %v589 = vpop.f32.mrf.mxu0
  %v590 = vadd.f32 %v561, %v589
  %591 = vdwg.mxu0
  %v592 = vadd.f32 %v404, %v523
  %v593 = vadd.f32 %v405, %v581
  %v594 = vadd.f32 %v406, %v526
  %v595 = vadd.f32 %v407, %v584
  %v596 = vadd.f32 %v408, %v529
  %v597 = vadd.f32 %v409, %v587
  %v598 = vadd.f32 %v410, %v532
  %v599 = vadd.f32 %v411, %v590
  %600 = vst [vmem:[%s8] sm:$0xff] %v592
  %601 = vst [vmem:[%s8 + $0x8] sm:$0xff] %v593
  %602 = vst [vmem:[%s8 + $0x10] sm:$0xff] %v594
  %603 = vst [vmem:[%s8 + $0x18] sm:$0xff] %v595
  %604 = vst [vmem:[%s8 + $0x20] sm:$0xff] %v596
  %605 = vst [vmem:[%s8 + $0x28] sm:$0xff] %v597
  %606 = vst [vmem:[%s8 + $0x30] sm:$0xff] %v598
  %607 = vst [vmem:[%s8 + $0x38] sm:$0xff] %v599
  // Predicated region
  $region34: #{inverted_residual_forward.1} parent=0 // pred_check
    _
  $region35: #{inverted_residual_forward.1} parent=0 // pred_check_branch
    %609 = sbr.rel (0) target = $region37
  $region36: #{inverted_residual_forward.1} parent=0 // pred_region
    _
  $region37: #{inverted_residual_forward.1} parent=0 // pred_fallthru
    _
  // Predicated region
  $region38: #{inverted_residual_forward.1} parent=0 // pred_check
    _
  $region39: #{inverted_residual_forward.1} parent=0 // pred_check_branch
    %611 = sbr.rel (0) target = $region41
  $region40: #{inverted_residual_forward.1} parent=0 // pred_region
    _
  $region41: #{inverted_residual_forward.1} parent=0 // pred_fallthru
    _

</llo_original>
